<compile_context>
chip_gen: v6e
topology: v6e:2x2x1
jax: 0.10.0
libtpu: 0.0.40
codegen_flags: <defaults>
</compile_context>

<pallas_src>
import functools

import jax
import jax.numpy as jnp
from jax import lax
from jax.experimental import pallas as pl
from jax.experimental.pallas import tpu as pltpu


def _round_up(a: int, b: int) -> int:
    return -(-a // b) * b


def _focal_partial_kernel(x_ref, t_ref, o_ref, *, alpha, gamma, rows, cols,
                          tr, tc, mask_rows, mask_cols, binary_targets):
    """One (tr, tc) block -> per-lane partial sums of the focal loss.

    x_ref / t_ref: (tr, tc) blocks in their ORIGINAL dtypes (cast here).
    o_ref: (1, 1, 1, tc) f32 per-block, per-lane partial sums.
    """
    x = x_ref[...].astype(jnp.float32)
    t = t_ref[...].astype(jnp.float32)

    # Numerically stable BCE-with-logits with a single exp:
    #   bce = max(x, 0) - x*t + log1p(exp(-|x|))
    e = jnp.exp(-jnp.abs(x))                              # EUP exp (1)
    bce = jnp.maximum(x, 0.0) - x * t + jnp.log1p(e)      # EUP log1p (2)

    if binary_targets:
        # pt = exp(-bce) = exp(x*t - max(x,0)) / (1 + e).  For t in {0, 1} the
        # numerator is a select of {1, e} -> no third transcendental.
        num = jnp.where(t >= 0.5,
                        jnp.where(x >= 0.0, 1.0, e),
                        jnp.where(x >= 0.0, e, 1.0))
        d = 1.0 + e
        inv = pl.reciprocal(d, approx=True)
        inv = inv * (2.0 - d * inv)        # one Newton step -> ~f32 accuracy
        pt = num * inv
    else:
        # Soft targets: keep the exact reference formulation.
        pt = jnp.exp(-bce)

    om_pt = jnp.maximum(1.0 - pt, 0.0)     # clamp: approx-recip can give pt>1 by eps
    if float(gamma) == 2.0:
        mod = jnp.square(om_pt)
    elif float(gamma).is_integer():
        mod = lax.integer_pow(om_pt, int(gamma))
    else:
        mod = om_pt ** gamma
    focal = alpha * mod * bce

    # Mask the ragged tails of edge blocks (Pallas pads out-of-bounds reads with
    # unspecified values; jnp.where/select discards them even if they are NaN/Inf).
    if mask_rows or mask_cols:
        valid = None
        if mask_rows:
            r_ids = lax.broadcasted_iota(jnp.int32, focal.shape, 0) + pl.program_id(0) * tr
            valid = r_ids < rows
        if mask_cols:
            c_ids = lax.broadcasted_iota(jnp.int32, focal.shape, 1) + pl.program_id(1) * tc
            c_ok = c_ids < cols
            valid = c_ok if valid is None else (valid & c_ok)
        focal = jnp.where(valid, focal, 0.0)

    # Reduce over the sublane (row) axis only; the tiny partials array is
    # reduced in plain JAX outside the kernel.
    o_ref[...] = jnp.sum(focal, axis=0, keepdims=True)[None, None]


def _choose_tiles(rows: int, cols: int, target_block_elems: int):
    """Pick (tr, tc) with tr*round_up(tc,128) ~ target, honoring TPU tile rules."""
    # Column tile: full width when modest, else a 128-multiple (tail masked).
    if cols <= 2048:
        tc = cols                                     # == full dim -> always legal
    else:
        r_pad = _round_up(min(rows, 256), 8)
        tc = max(128, (target_block_elems // r_pad) // 128 * 128)
        tc = min(tc, _round_up(cols, 128))
    c_pad = _round_up(tc, 128)
    # Row tile: multiple of 32 (min-sublane-safe for f32/bf16/int8) or all rows.
    tr = max(32, (target_block_elems // c_pad) // 32 * 32)
    if tr >= rows:
        tr = rows                                     # == full dim -> always legal
    return tr, tc


def focal_loss(inputs, targets, alpha=0.25, gamma=2, reduction="mean",
               binary_targets=True, target_block_elems=512 * 1024):
    """Pallas TPU focal loss.  inputs/targets: same shape, any rank.

    binary_targets=True enables the 2-transcendental pt fast path (exact when
    targets are 0/1); pass False for soft-label targets.
    """
    assert inputs.shape == targets.shape
    n = inputs.size

    # Collapse leading dims only (cheap for contiguous arrays) — no pad, no astype.
    if inputs.ndim == 0:
        x2, t2 = inputs.reshape(1, 1), targets.reshape(1, 1)
    elif inputs.ndim == 1:
        x2, t2 = inputs.reshape(1, -1), targets.reshape(1, -1)
    else:
        x2 = inputs.reshape(-1, inputs.shape[-1])
        t2 = targets.reshape(-1, targets.shape[-1])
    if t2.dtype == jnp.bool_:
        t2 = t2.astype(jnp.float32)   # rare path; keeps in-kernel cast simple

    rows, cols = x2.shape
    tr, tc = _choose_tiles(rows, cols, target_block_elems)
    gr = pl.cdiv(rows, tr)
    gc = pl.cdiv(cols, tc)
    mask_rows = (rows % tr) != 0
    mask_cols = (cols % tc) != 0

    kernel = functools.partial(
        _focal_partial_kernel, alpha=float(alpha), gamma=gamma,
        rows=rows, cols=cols, tr=tr, tc=tc,
        mask_rows=mask_rows, mask_cols=mask_cols,
        binary_targets=bool(binary_targets))

    partials = pl.pallas_call(
        kernel,
        out_shape=jax.ShapeDtypeStruct((gr, gc, 1, tc), jnp.float32),
        grid_spec=pl.GridSpec(
            grid=(gr, gc),
            in_specs=[
                pl.BlockSpec((tr, tc), lambda i, j: (i, j)),
                pl.BlockSpec((tr, tc), lambda i, j: (i, j)),
            ],
            out_specs=pl.BlockSpec((1, 1, 1, tc), lambda i, j: (i, j, 0, 0)),
        ),
        compiler_params=pltpu.CompilerParams(
            dimension_semantics=("parallel", "parallel"),
            vmem_limit_bytes=32 * 1024 * 1024,
        ),
    )(x2, t2)

    total = jnp.sum(partials)
    if reduction == "mean":
        return total / n
    if reduction == "sum":
        return total
    # TODO(synk): reduction='none' (per-element focal map output) not implemented
    # in the Pallas path.
    raise NotImplementedError("reduction must be 'mean' or 'sum'")


def focal_loss_ref(inputs, targets, alpha=0.25, gamma=2, reduction="mean"):
    x = inputs.astype(jnp.float32)
    t = targets.astype(jnp.float32)
    bce = jnp.maximum(x, 0.0) - x * t + jnp.log1p(jnp.exp(-jnp.abs(x)))
    pt = jnp.exp(-bce)
    fl = alpha * (1.0 - pt) ** gamma * bce
    return fl.mean() if reduction == "mean" else fl.sum()


if __name__ == "__main__":
    key = jax.random.PRNGKey(0)
    k1, k2, k3, k4, k5, k6, k7 = jax.random.split(key, 7)

    # Small shapes consistent with the module's use (per-token binary logits):
    # batch=2, seq=8.
    logits = jax.random.normal(k1, (2, 8), dtype=jnp.float32) * 3.0
    labels = jax.random.bernoulli(k2, 0.3, (2, 8)).astype(jnp.float32)
    out = jax.block_until_ready(focal_loss(logits, labels, alpha=0.25, gamma=2))
    ref = focal_loss_ref(logits, labels)
    assert out.shape == ()
    assert jnp.allclose(out, ref, rtol=1e-4, atol=1e-6), (out, ref)

    # Larger check: single-block path + 'sum' reduction (last dims not 128-aligned).
    logits2 = jax.random.normal(k3, (600, 600), dtype=jnp.float32) * 2.0
    labels2 = jax.random.bernoulli(k4, 0.5, (600, 600)).astype(jnp.float32)
    out2 = jax.block_until_ready(focal_loss(logits2, labels2, reduction="sum"))
    ref2 = focal_loss_ref(logits2, labels2, reduction="sum")
    assert jnp.allclose(out2, ref2, rtol=1e-4, atol=1e-2), (out2, ref2)

    # Multi-block grid with ragged row AND column tails + bf16 logits
    # (exercises in-kernel cast and in-kernel tail masking; no wrapper passes).
    logits3 = (jax.random.normal(k5, (700, 2500), dtype=jnp.float32) * 2.0
               ).astype(jnp.bfloat16)
    labels3 = jax.random.bernoulli(k6, 0.4, (700, 2500)).astype(jnp.float32)
    out3 = jax.block_until_ready(focal_loss(logits3, labels3, reduction="mean"))
    ref3 = focal_loss_ref(logits3.astype(jnp.float32), labels3)
    assert jnp.allclose(out3, ref3, rtol=2e-4, atol=1e-6), (out3, ref3)

    # Soft (non-binary) targets: exact exp(-bce) fallback path.
    logits4 = jax.random.normal(k7, (16, 128), dtype=jnp.float32)
    soft = jax.random.uniform(k1, (16, 128), dtype=jnp.float32)
    out4 = jax.block_until_ready(focal_loss(logits4, soft, binary_targets=False))
    ref4 = focal_loss_ref(logits4, soft)
    assert jnp.allclose(out4, ref4, rtol=1e-4, atol=1e-6), (out4, ref4)

    print("KERNEL_OK")
</pallas_src>

<mosaic_0001>
module attributes {stable_mosaic.version = 11 : i64} {
  func.func @_focal_partial_kernel(%arg0: i32, %arg1: i32, %arg2: memref<2x8xf32, #tpu.memory_space<vmem>>, %arg3: memref<2x8xf32, #tpu.memory_space<vmem>>, %arg4: memref<1x1x1x8xf32, #tpu.memory_space<vmem>>) attributes {dimension_semantics = [#tpu.dimension_semantics<parallel>, #tpu.dimension_semantics<parallel>], iteration_bounds = array<i64: 1, 1>, scalar_prefetch = 0 : i64, scratch_operands = 0 : i64, tpu.core_type = #tpu.core_type<tc>, window_params = [{transform_indices = @transform_0, window_bounds = array<i64: 2, 8>}, {transform_indices = @transform_1, window_bounds = array<i64: 2, 8>}, {transform_indices = @transform_2, window_bounds = array<i64: 1, 1, 1, 8>}]} {
    %c0 = arith.constant 0 : index
    %c0_0 = arith.constant 0 : index
    %0 = vector.load %arg2[%c0, %c0_0] : memref<2x8xf32, #tpu.memory_space<vmem>>, vector<2x8xf32>
    %c0_1 = arith.constant 0 : index
    %c0_2 = arith.constant 0 : index
    %1 = vector.load %arg3[%c0_1, %c0_2] : memref<2x8xf32, #tpu.memory_space<vmem>>, vector<2x8xf32>
    %2 = math.absf %0 : vector<2x8xf32>
    %cst = arith.constant 0.000000e+00 : f32
    %3 = vector.broadcast %cst : f32 to vector<2x8xf32>
    %4 = arith.subf %3, %2 : vector<2x8xf32>
    %5 = math.exp %4 : vector<2x8xf32>
    %cst_3 = arith.constant 0.000000e+00 : f32
    %6 = vector.broadcast %cst_3 : f32 to vector<2x8xf32>
    %7 = arith.maximumf %0, %6 : vector<2x8xf32>
    %8 = arith.mulf %0, %1 : vector<2x8xf32>
    %9 = arith.subf %7, %8 : vector<2x8xf32>
    %10 = math.log1p %5 : vector<2x8xf32>
    %11 = arith.addf %9, %10 : vector<2x8xf32>
    %cst_4 = arith.constant 5.000000e-01 : f32
    %12 = vector.broadcast %cst_4 : f32 to vector<2x8xf32>
    %13 = arith.cmpf oge, %1, %12 : vector<2x8xf32>
    %cst_5 = arith.constant 0.000000e+00 : f32
    %14 = vector.broadcast %cst_5 : f32 to vector<2x8xf32>
    %15 = arith.cmpf oge, %0, %14 : vector<2x8xf32>
    %cst_6 = arith.constant 1.000000e+00 : f32
    %16 = vector.broadcast %cst_6 : f32 to vector<2x8xf32>
    %17 = arith.select %15, %16, %5 : vector<2x8xi1>, vector<2x8xf32>
    %cst_7 = arith.constant 0.000000e+00 : f32
    %18 = vector.broadcast %cst_7 : f32 to vector<2x8xf32>
    %19 = arith.cmpf oge, %0, %18 : vector<2x8xf32>
    %cst_8 = arith.constant 1.000000e+00 : f32
    %20 = vector.broadcast %cst_8 : f32 to vector<2x8xf32>
    %21 = arith.select %19, %5, %20 : vector<2x8xi1>, vector<2x8xf32>
    %22 = arith.select %13, %17, %21 : vector<2x8xi1>, vector<2x8xf32>
    %cst_9 = arith.constant 1.000000e+00 : f32
    %23 = vector.broadcast %cst_9 : f32 to vector<2x8xf32>
    %24 = arith.addf %23, %5 : vector<2x8xf32>
    %25 = tpu.reciprocal %24 {approx = true} : vector<2x8xf32> -> vector<2x8xf32>
    %26 = arith.mulf %24, %25 : vector<2x8xf32>
    %cst_10 = arith.constant 2.000000e+00 : f32
    %27 = vector.broadcast %cst_10 : f32 to vector<2x8xf32>
    %28 = arith.subf %27, %26 : vector<2x8xf32>
    %29 = arith.mulf %25, %28 : vector<2x8xf32>
    %30 = arith.mulf %22, %29 : vector<2x8xf32>
    %cst_11 = arith.constant 1.000000e+00 : f32
    %31 = vector.broadcast %cst_11 : f32 to vector<2x8xf32>
    %32 = arith.subf %31, %30 : vector<2x8xf32>
    %cst_12 = arith.constant 0.000000e+00 : f32
    %33 = vector.broadcast %cst_12 : f32 to vector<2x8xf32>
    %34 = arith.maximumf %32, %33 : vector<2x8xf32>
    %35 = arith.mulf %34, %34 : vector<2x8xf32>
    %cst_13 = arith.constant 2.500000e-01 : f32
    %36 = vector.broadcast %cst_13 : f32 to vector<2x8xf32>
    %37 = arith.mulf %36, %35 : vector<2x8xf32>
    %38 = arith.mulf %37, %11 : vector<2x8xf32>
    %cst_14 = arith.constant dense<0.000000e+00> : vector<8xf32>
    %39 = vector.multi_reduction <add>, %38, %cst_14 [0] : vector<2x8xf32> to vector<8xf32>
    %40 = vector.shape_cast %39 : vector<8xf32> to vector<1x8xf32>
    %41 = vector.shape_cast %40 : vector<1x8xf32> to vector<1x1x1x8xf32>
    %c0_15 = arith.constant 0 : index
    %c0_16 = arith.constant 0 : index
    %c0_17 = arith.constant 0 : index
    %c0_18 = arith.constant 0 : index
    %42 = vector.load %arg4[%c0_15, %c0_16, %c0_17, %c0_18] : memref<1x1x1x8xf32, #tpu.memory_space<vmem>>, vector<1x1x1x8xf32>
    tpu.vector_store %arg4[%c0_15, %c0_16, %c0_17, %c0_18], %41 {strides = array<i32>} : memref<1x1x1x8xf32, #tpu.memory_space<vmem>>, vector<1x1x1x8xf32>,
    return
  }
  func.func @transform_0(%arg0: i32, %arg1: i32) -> (i32, i32) {
    %c0_i32 = arith.constant 0 : i32
    return %arg0, %arg1 : i32, i32
  }
  func.func @transform_1(%arg0: i32, %arg1: i32) -> (i32, i32) {
    %c0_i32 = arith.constant 0 : i32
    return %arg0, %arg1 : i32, i32
  }
  func.func @transform_2(%arg0: i32, %arg1: i32) -> (i32, i32, i32, i32) {
    %c0_i32 = arith.constant 0 : i32
    %c0_i32_0 = arith.constant 0 : i32
    %c0_i32_1 = arith.constant 0 : i32
    return %arg0, %arg1, %c0_i32, %c0_i32_0 : i32, i32, i32, i32
  }
}

</mosaic_0001>

<llo_original>
// kernel: tpu_custom_call.1
$region0: #{tpu_custom_call.1}
  #allocation0 [shape = 'u32[]', space=smem, size = 0x4, offset = 0x4, fixed_abs, tag = 'smem constant byte address 0x4 - core index']
  #allocation1 [shape = 'u32[144,128]{1,0:T(1,128)}', space=vmem, size = 0x12000, scoped, tag = 'internal scratch']
  %s0 = inlined_call_operand.hbm [shape: f32[2,8], index: 0, kind: input, shape index: {}]
  %s1 = inlined_call_operand.hbm [shape: f32[2,8], index: 1, kind: input, shape index: {}]
  %s2 = inlined_call_operand.hbm [shape: f32[1,1,1,8], index: 2, kind: output, shape index: {}]
  %s3 = sld [smem:[#allocation0]]
  $region26: #{tpu_custom_call.1} parent=0
    _
  %s5 = ssub.s32 1, %s3
  %s6 = scalar_select 0, %s5, %s3
  $region1: #{tpu_custom_call.1} parent=0
    #allocation2 [shape = 'u8[1024]{0}', space=vmem, size = 0x400, scoped, tag = 'input window, operand 0, single buffered']
    #allocation3 [shape = 's32[1]{0}', space=sflag, size = 0x4, scoped, tag = 'scoped memory for tpu_custom_call.1']
    #allocation4 [shape = 's32[1]{0}', space=sflag, size = 0x4, scoped, tag = 'scoped memory for tpu_custom_call.1']
    #allocation5 [shape = 'u8[1024]{0}', space=vmem, size = 0x400, scoped, tag = 'input window, operand 1, single buffered']
    #allocation6 [shape = 's32[1]{0}', space=sflag, size = 0x4, scoped, tag = 'scoped memory for tpu_custom_call.1']
    #allocation7 [shape = 'u8[512]{0}', space=vmem, size = 0x400, scoped, tag = 'output window, operand 0, single buffered']
    %7 = vsyncpa [#allocation3], 0
    %8 = vsyncpa [#allocation6], 0
    %9 = vsyncpa [#allocation4], 0
    // Predicated region
    $region2: #{tpu_custom_call.1} parent=1 // pred_check
      _
    $region3: #{tpu_custom_call.1} parent=1 // pred_check_branch
      %11 = sbr.rel (0) target = $region5
    $region4: #{tpu_custom_call.1} parent=1 // pred_region
      %s13 = ssub.s32 32, 32
      %14 = vsyncadd [#allocation3], %s13
      %s16 = sshll.u32 [#allocation2], 4
      %s17 = int_to_ptr.vmem [resolvable:$true] %s16
      %19 = dma.hbm_to_vmem [thread:$0]  %s0, 32, %s17, [#allocation3]
    $region5: #{tpu_custom_call.1} parent=1 // pred_fallthru
      _
    // Predicated region
    $region6: #{tpu_custom_call.1} parent=1 // pred_check
      _
    $region7: #{tpu_custom_call.1} parent=1 // pred_check_branch
      %21 = sbr.rel (0) target = $region9
    $region8: #{tpu_custom_call.1} parent=1 // pred_region
      %s23 = ssub.s32 32, 32
      %24 = vsyncadd [#allocation6], %s23
      %s26 = sshll.u32 [#allocation5], 4
      %s27 = int_to_ptr.vmem [resolvable:$true] %s26
      %29 = dma.hbm_to_vmem [thread:$0]  %s1, 32, %s27, [#allocation6]
    $region9: #{tpu_custom_call.1} parent=1 // pred_fallthru
      _
    // Predicated region
    $region10: #{tpu_custom_call.1} parent=1 // pred_check
      _
    $region11: #{tpu_custom_call.1} parent=1 // pred_check_branch
      %31 = sbr.rel (0) target = $region13
    $region12: #{tpu_custom_call.1} parent=1 // pred_region
      %32 = dma.done [#allocation3], 32
    $region13: #{tpu_custom_call.1} parent=1 // pred_fallthru
      _
    // Predicated region
    $region14: #{tpu_custom_call.1} parent=1 // pred_check
      _
    $region15: #{tpu_custom_call.1} parent=1 // pred_check_branch
      %34 = sbr.rel (0) target = $region17
    $region16: #{tpu_custom_call.1} parent=1 // pred_region
      %35 = dma.done [#allocation6], 32
    $region17: #{tpu_custom_call.1} parent=1 // pred_fallthru
      _
    %v36 = vld [vmem:[#allocation2] sm:$0x3]
    %v37 = vld [vmem:[#allocation5] sm:$0x3]
    %v38 = vand.u32 2147483647, %v36
    %v39 = vsub.f32 0.0, %v38
    %v40 = vmul.f32 %v39, 1.442695
    %v41 = vpow.pop %v40
    %v42 = vmax.f32 %v36, 0.0
    %v43 = vmul.f32 %v36, %v37
    %v44 = vsub.f32 %v42, %v43
    %v45 = vadd.f32 %v41, 1.0
    %v46 = vlog2.pop %v45
    %v47 = vmul.f32 %v46, 0.6931472
    %v48 = vmul.f32 -0.5, %v41
    %v49 = vadd.f32 %v48, 1.0
    %v50 = vmul.f32 %v49, %v41
    %v51 = vand.u32 2147483647, %v41
    %vm52 = vcmp.lt.f32.partialorder %v51, 0.0004427343
    %v53 = vsel %vm52, %v50, %v47
    %v54 = vadd.f32 %v44, %v53
    %vm55 = vcmp.ge.f32.partialorder %v37, 0.5
    %vm56 = vcmp.ge.f32.partialorder %v36, 0.0
    %v57 = vsel %vm56, 1.0, %v41
    %v58 = vsel %vm56, %v41, 1.0
    %v59 = vsel %vm55, %v57, %v58
    %v60 = vadd.f32 %v41, 1.0
    %v61 = vrcp.pop %v60
    %v62 = vmul.f32 %v60, %v61
    %v63 = vsub.f32 2.0, %v62
    %v64 = vmul.f32 %v61, %v63
    %v65 = vmul.f32 %v59, %v64
    %v66 = vsub.f32 1.0, %v65
    %v67 = vmax.f32 %v66, 0.0
    %v68 = vmul.f32 %v67, %v67
    %v69 = vmul.f32 %v68, 0.25
    %v70 = vmul.f32 %v69, %v54
    %vm71 = vcmask 58368
    %v72 = vsel %vm71, %v70, 0.0
    %v73 = vrot.slane %v72, 4
    %v74 = vadd.f32 %v72, %v73
    %v75 = vrot.slane %v74, 2
    %v76 = vadd.f32 %v74, %v75
    %v77 = vrot.slane %v76, 1
    %v78 = vadd.f32 %v76, %v77
    %vm79 = vcmask 57344
    %80 = vst.msk [vmem:[#allocation7] sm:$0x1] %vm79, %v78
    // Predicated region
    $region18: #{tpu_custom_call.1} parent=1 // pred_check
      _
    $region19: #{tpu_custom_call.1} parent=1 // pred_check_branch
      %82 = sbr.rel (0) target = $region21
    $region20: #{tpu_custom_call.1} parent=1 // pred_region
      %s84 = ssub.s32 16, 16
      %85 = vsyncadd [#allocation4], %s84
      %s87 = sshll.u32 [#allocation7], 4
      %s88 = int_to_ptr.vmem [resolvable:$true] %s87
      %90 = dma.vmem_to_hbm [thread:$0]  %s88, 16, %s2, [#allocation4]
    $region21: #{tpu_custom_call.1} parent=1 // pred_fallthru
      _
    // Predicated region
    $region22: #{tpu_custom_call.1} parent=1 // pred_check
      _
    $region23: #{tpu_custom_call.1} parent=1 // pred_check_branch
      %92 = sbr.rel (0) target = $region25
    $region24: #{tpu_custom_call.1} parent=1 // pred_region
      %93 = dma.done [#allocation4], 16
    $region25: #{tpu_custom_call.1} parent=1 // pred_fallthru
      _
    %94 = vsyncpa [#allocation3], 1
    %95 = vsyncpa [#allocation6], 1
    %96 = vsyncpa [#allocation4], 1

</llo_original>
